<compile_context>
chip_gen: v6e
topology: v6e:2x2x1
jax: 0.10.0
libtpu: 0.0.40
codegen_flags: <defaults>
</compile_context>

<pallas_src>
import jax
import jax.numpy as jnp
from jax import lax
from jax.experimental import pallas as pl
from jax.experimental.pallas import tpu as pltpu


def _round_up(x: int, m: int) -> int:
    return (x + m - 1) // m * m


def _tile_for(B_p: int, block_b: int):
    """Pick a lane-axis (batch) tile that divides B_p (B_p is a multiple of 128)."""
    TB = max(128, (min(block_b, B_p) // 128) * 128)
    while B_p % TB != 0:
        TB -= 128
    # Prefer a grid of 2 when a single tile would cover everything, so
    # ("parallel",) can shard across v7x's two TensorCores.
    if B_p // TB == 1 and B_p % 256 == 0:
        TB = B_p // 2
    return TB, B_p // TB


def ode_func_kernel(y_ref, w1_ref, b1_ref, w2_ref, b2_ref, o_ref):
    """o^T = W2 @ tanh(W1 @ y^T + b1) + b2 for one batch tile (batch on lanes).

    y_ref  : [I_p, TB]   transposed state tile (batch on the 128-lane axis)
    w1_ref : [H_p, I_p]  PyTorch (out, in) layout -- resident in VMEM
    b1_ref : [H_p, 1]
    w2_ref : [O_p, H_p]
    b2_ref : [O_p, 1]
    o_ref  : [O_p, TB]   lane-dense output tile (f32)
    """
    dn = (((1,), (0,)), ((), ()))  # plain [M,K] @ [K,N]

    # Cast the state to the weight dtype (no-op for f32; bf16 on v6e/v7x).
    x = y_ref[...].astype(w1_ref.dtype)
    h = lax.dot_general(w1_ref[...], x, dn, preferred_element_type=jnp.float32)
    # Bias + tanh stay f32 (EUP transcendental; v5e has no bf16 elementwise path).
    h = jnp.tanh(h + b1_ref[...].astype(jnp.float32))

    out = lax.dot_general(w2_ref[...], h.astype(w2_ref.dtype), dn,
                          preferred_element_type=jnp.float32)
    o_ref[...] = (out + b2_ref[...].astype(jnp.float32)).astype(o_ref.dtype)


def prepare_params(w1, b1, w2, b2, *, matmul_dtype=None):
    """Pad (and optionally cast) the weights once, outside any solver loop."""
    H, I = w1.shape
    O, _ = w2.shape
    I_p, H_p, O_p = _round_up(I, 8), _round_up(H, 8), _round_up(O, 8)
    wd = matmul_dtype if matmul_dtype is not None else w1.dtype
    w1_p = jnp.zeros((H_p, I_p), wd).at[:H, :I].set(w1.astype(wd))
    b1_p = jnp.zeros((H_p, 1), jnp.float32).at[:H, 0].set(b1.astype(jnp.float32))
    w2_p = jnp.zeros((O_p, H_p), wd).at[:O, :H].set(w2.astype(wd))
    b2_p = jnp.zeros((O_p, 1), jnp.float32).at[:O, 0].set(b2.astype(jnp.float32))
    return {"w1": w1_p, "b1": b1_p, "w2": w2_p, "b2": b2_p}


def prepare_state(y):
    """[B, I] -> padded transposed [I_p, B_p] state (do once per solver run)."""
    B, I = y.shape
    I_p = _round_up(I, 8)
    B_p = _round_up(B, 128)
    return jnp.zeros((I_p, B_p), y.dtype).at[:I, :B].set(y.T)


def extract_state(oT_p, B, O):
    """Padded transposed [O_p, B_p] -> [B, O] (do once per solver run)."""
    return oT_p[:O, :B].T


def ode_func_forward_padded(yT_p, params, *, block_b=2048):
    """One ODE_Func evaluation on the padded, transposed state.

    yT_p   : [I_p, B_p]  (B_p multiple of 128); output [O_p, B_p] f32, which can
             be fed straight back in when input_size == output_size.
    """
    I_p, B_p = yT_p.shape
    w1_p, b1_p, w2_p, b2_p = params["w1"], params["b1"], params["w2"], params["b2"]
    H_p = w1_p.shape[0]
    O_p = w2_p.shape[0]
    assert w1_p.shape[1] == I_p and w2_p.shape[1] == H_p

    TB, n_tiles = _tile_for(B_p, block_b)

    return pl.pallas_call(
        ode_func_kernel,
        out_shape=jax.ShapeDtypeStruct((O_p, B_p), jnp.float32),
        grid_spec=pltpu.PrefetchScalarGridSpec(
            num_scalar_prefetch=0,
            grid=(n_tiles,),
            in_specs=[
                pl.BlockSpec((I_p, TB), lambda i: (0, i)),    # state: tiled over batch
                pl.BlockSpec((H_p, I_p), lambda i: (0, 0)),   # w1: resident in VMEM
                pl.BlockSpec((H_p, 1), lambda i: (0, 0)),     # b1: resident
                pl.BlockSpec((O_p, H_p), lambda i: (0, 0)),   # w2: resident
                pl.BlockSpec((O_p, 1), lambda i: (0, 0)),     # b2: resident
            ],
            out_specs=pl.BlockSpec((O_p, TB), lambda i: (0, i)),
        ),
        compiler_params=pltpu.CompilerParams(
            # Independent batch tiles -> shard across both TCs on v7x.
            dimension_semantics=("parallel",),
        ),
    )(yT_p, w1_p, b1_p, w2_p, b2_p)


def ode_func_forward(y, w1, b1, w2, b2, t=None, *, block_b=2048, matmul_dtype=None):
    """Convenience one-shot wrapper matching ODE_Func.forward(t, y) (t unused).

    For repeated evaluations (ODE solver), call prepare_params / prepare_state
    once and ode_func_forward_padded per step instead.
    """
    del t  # unused, as in the PyTorch module
    B, _ = y.shape
    O = w2.shape[0]
    params = prepare_params(w1, b1, w2, b2, matmul_dtype=matmul_dtype)
    yT_p = prepare_state(y)
    oT_p = ode_func_forward_padded(yT_p, params, block_b=block_b)
    return extract_state(oT_p, B, O)


if __name__ == "__main__":
    # Shapes consistent with ODE_Func(input_size, hidden_layer_size, output_size, cb).
    batch = 256
    input_size = 16
    hidden_size = 32
    output_size = 16

    key = jax.random.PRNGKey(0)
    k_y, k_w1, k_b1, k_w2, k_b2 = jax.random.split(key, 5)

    y = jax.random.normal(k_y, (batch, input_size), dtype=jnp.float32)
    w1 = jax.random.normal(k_w1, (hidden_size, input_size), dtype=jnp.float32) * 0.1
    b1 = jax.random.normal(k_b1, (hidden_size,), dtype=jnp.float32) * 0.1
    w2 = jax.random.normal(k_w2, (output_size, hidden_size), dtype=jnp.float32) * 0.1
    b2 = jax.random.normal(k_b2, (output_size,), dtype=jnp.float32) * 0.1

    t = jnp.float32(0.0)  # unused by the forward pass, kept for signature parity

    def ref_f(x):
        return jnp.tanh(x @ w1.T + b1) @ w2.T + b2

    # --- f32 path (exact parity with the PyTorch module) -------------------
    out = jax.block_until_ready(ode_func_forward(y, w1, b1, w2, b2, t))
    ref = ref_f(y)
    assert out.shape == (batch, output_size)
    assert jnp.allclose(out, ref, atol=1e-5, rtol=1e-5)

    # --- resident padded-state usage (solver-style: pad once, chain, slice) -
    params = prepare_params(w1, b1, w2, b2)
    yT_p = prepare_state(y)
    o1T = ode_func_forward_padded(yT_p, params)       # f(y)
    o2T = ode_func_forward_padded(o1T, params)        # f(f(y)), state never repadded
    out_chain = jax.block_until_ready(extract_state(o2T, batch, output_size))
    assert jnp.allclose(out_chain, ref_f(ref_f(y)), atol=1e-4, rtol=1e-4)

    # --- bf16 matmul operands (recommended default on v6e/v7x) -------------
    out_bf16 = jax.block_until_ready(
        ode_func_forward(y, w1, b1, w2, b2, t, matmul_dtype=jnp.bfloat16))
    assert jnp.allclose(out_bf16, ref, atol=2e-2, rtol=2e-2)

    print("KERNEL_OK")
</pallas_src>

<mosaic_0001>
module attributes {stable_mosaic.version = 11 : i64} {
  func.func @ode_func_kernel(%arg0: i32, %arg1: memref<16x128xf32, #tpu.memory_space<vmem>>, %arg2: memref<32x16xf32, #tpu.memory_space<vmem>>, %arg3: memref<32x1xf32, #tpu.memory_space<vmem>>, %arg4: memref<16x32xf32, #tpu.memory_space<vmem>>, %arg5: memref<16x1xf32, #tpu.memory_space<vmem>>, %arg6: memref<16x128xf32, #tpu.memory_space<vmem>>) attributes {dimension_semantics = [#tpu.dimension_semantics<parallel>], iteration_bounds = array<i64: 2>, scalar_prefetch = 0 : i64, scratch_operands = 0 : i64, tpu.core_type = #tpu.core_type<tc>, window_params = [{transform_indices = @transform_0, window_bounds = array<i64: 16, 128>}, {pipeline_mode = #tpu.pipeline_mode<synchronous>, transform_indices = @transform_1, window_bounds = array<i64: 32, 16>}, {pipeline_mode = #tpu.pipeline_mode<synchronous>, transform_indices = @transform_2, window_bounds = array<i64: 32, 1>}, {pipeline_mode = #tpu.pipeline_mode<synchronous>, transform_indices = @transform_3, window_bounds = array<i64: 16, 32>}, {pipeline_mode = #tpu.pipeline_mode<synchronous>, transform_indices = @transform_4, window_bounds = array<i64: 16, 1>}, {transform_indices = @transform_5, window_bounds = array<i64: 16, 128>}]} {
    %c0 = arith.constant 0 : index
    %c0_0 = arith.constant 0 : index
    %0 = vector.load %arg1[%c0, %c0_0] : memref<16x128xf32, #tpu.memory_space<vmem>>, vector<16x128xf32>
    %c0_1 = arith.constant 0 : index
    %c0_2 = arith.constant 0 : index
    %1 = vector.load %arg2[%c0_1, %c0_2] : memref<32x16xf32, #tpu.memory_space<vmem>>, vector<32x16xf32>
    %cst = arith.constant dense<0.000000e+00> : vector<32x128xf32>
    %2 = tpu.matmul %1, %0, %cst {dimension_numbers = #tpu.dot_dimension_numbers<[1], [0], [0], [1], [0, 0, 1, 1], [], []>} : vector<32x16xf32>, vector<16x128xf32>, vector<32x128xf32> -> vector<32x128xf32>
    %c0_3 = arith.constant 0 : index
    %c0_4 = arith.constant 0 : index
    %3 = vector.load %arg3[%c0_3, %c0_4] : memref<32x1xf32, #tpu.memory_space<vmem>>, vector<32x1xf32>
    %4 = vector.broadcast %3 : vector<32x1xf32> to vector<32x128xf32>
    %5 = arith.addf %2, %4 : vector<32x128xf32>
    %6 = math.tanh %5 : vector<32x128xf32>
    %c0_5 = arith.constant 0 : index
    %c0_6 = arith.constant 0 : index
    %7 = vector.load %arg4[%c0_5, %c0_6] : memref<16x32xf32, #tpu.memory_space<vmem>>, vector<16x32xf32>
    %cst_7 = arith.constant dense<0.000000e+00> : vector<16x128xf32>
    %8 = tpu.matmul %7, %6, %cst_7 {dimension_numbers = #tpu.dot_dimension_numbers<[1], [0], [0], [1], [0, 0, 1, 1], [], []>} : vector<16x32xf32>, vector<32x128xf32>, vector<16x128xf32> -> vector<16x128xf32>
    %c0_8 = arith.constant 0 : index
    %c0_9 = arith.constant 0 : index
    %9 = vector.load %arg5[%c0_8, %c0_9] : memref<16x1xf32, #tpu.memory_space<vmem>>, vector<16x1xf32>
    %10 = vector.broadcast %9 : vector<16x1xf32> to vector<16x128xf32>
    %11 = arith.addf %8, %10 : vector<16x128xf32>
    %c0_10 = arith.constant 0 : index
    %c0_11 = arith.constant 0 : index
    %12 = vector.load %arg6[%c0_10, %c0_11] : memref<16x128xf32, #tpu.memory_space<vmem>>, vector<16x128xf32>
    tpu.vector_store %arg6[%c0_10, %c0_11], %11 {strides = array<i32>} : memref<16x128xf32, #tpu.memory_space<vmem>>, vector<16x128xf32>,
    return
  }
  func.func @transform_0(%arg0: i32) -> (i32, i32) {
    %c0_i32 = arith.constant 0 : i32
    %c0_i32_0 = arith.constant 0 : i32
    return %c0_i32, %arg0 : i32, i32
  }
  func.func @transform_1(%arg0: i32) -> (i32, i32) {
    %c0_i32 = arith.constant 0 : i32
    %c0_i32_0 = arith.constant 0 : i32
    %c0_i32_1 = arith.constant 0 : i32
    return %c0_i32, %c0_i32_0 : i32, i32
  }
  func.func @transform_2(%arg0: i32) -> (i32, i32) {
    %c0_i32 = arith.constant 0 : i32
    %c0_i32_0 = arith.constant 0 : i32
    %c0_i32_1 = arith.constant 0 : i32
    return %c0_i32, %c0_i32_0 : i32, i32
  }
  func.func @transform_3(%arg0: i32) -> (i32, i32) {
    %c0_i32 = arith.constant 0 : i32
    %c0_i32_0 = arith.constant 0 : i32
    %c0_i32_1 = arith.constant 0 : i32
    return %c0_i32, %c0_i32_0 : i32, i32
  }
  func.func @transform_4(%arg0: i32) -> (i32, i32) {
    %c0_i32 = arith.constant 0 : i32
    %c0_i32_0 = arith.constant 0 : i32
    %c0_i32_1 = arith.constant 0 : i32
    return %c0_i32, %c0_i32_0 : i32, i32
  }
  func.func @transform_5(%arg0: i32) -> (i32, i32) {
    %c0_i32 = arith.constant 0 : i32
    %c0_i32_0 = arith.constant 0 : i32
    return %c0_i32, %arg0 : i32, i32
  }
}

</mosaic_0001>

<llo_original>
// kernel: tpu_custom_call.1
$region0: #{tpu_custom_call.1}
  #allocation0 [shape = 'u32[]', space=smem, size = 0x4, offset = 0x4, fixed_abs, tag = 'smem constant byte address 0x4 - core index']
  #allocation1 [shape = 'u32[144,128]{1,0:T(1,128)}', space=vmem, size = 0x12000, scoped, tag = 'internal scratch']
  %s0 = inlined_call_operand.vmem [shape: f32[16,256], index: 0, kind: input, shape index: {}]
  %s1 = inlined_call_operand.vmem [shape: f32[32,16], index: 1, kind: input, shape index: {}]
  %s2 = inlined_call_operand.vmem [shape: f32[32,1], index: 2, kind: input, shape index: {}]
  %s3 = inlined_call_operand.vmem [shape: f32[16,32], index: 3, kind: input, shape index: {}]
  %s4 = inlined_call_operand.vmem [shape: f32[16,1], index: 4, kind: input, shape index: {}]
  %s5 = inlined_call_operand.hbm [shape: f32[16,256], index: 5, kind: output, shape index: {}]
  %s6 = sld [smem:[#allocation0]]
  $region91: #{tpu_custom_call.1} parent=0
    _
  %s8 = ssub.s32 1, %s6
  %s9 = scalar_select 0, %s8, %s6
  $region1: #{tpu_custom_call.1} parent=0
    #allocation2 [shape = 'u8[16384]{0}', space=vmem, size = 0x4000, scoped, tag = 'input window, operand 0']
    #allocation3 [shape = 'u8[16384]{0}', space=vmem, size = 0x4000, scoped, tag = 'output window, operand 0']
    #allocation4 [shape = 's32[2]{0}', space=sflag, size = 0x8, scoped, tag = 'scoped memory for tpu_custom_call.1']
    %10 = vsyncpa [#allocation4], 0
    %s11 = scalar_lea.sflag [#allocation4], 1
    %12 = vsyncpa %s11, 0
    loop: start=0, step=1, limit=4
    $region2: #{tpu_custom_call.1} parent=1 // loop_pre_header
      _
    $region3: #{tpu_custom_call.1} parent=1 // loop_header
      %s14 = sphi 0, %s18
      %p15 = scmp.ge.s32.totalorder %s14, 4
      %s24 = sphi 0, %s26
      %s27 = sphi 0, %s24
      %s28 = sphi 0, %s27
      %s44 = sphi 0, %s28
      %s48 = sphi 0, %s48
      %s50 = sphi 0, %s48
      %s51 = sphi 0, %s50
      %s65 = sphi 0, %s51
      %s69 = sphi 0, %s69
      %s71 = sphi 0, %s69
      %s72 = sphi 0, %s71
      %s86 = sphi 0, %s72
      %s90 = sphi 0, %s90
      %s92 = sphi 0, %s90
      %s93 = sphi 0, %s92
      %s107 = sphi 0, %s93
      %s111 = sphi 0, %s111
      %s113 = sphi 0, %s111
      %s114 = sphi 0, %s113
      %s128 = sphi 0, %s114
      %s134 = sphi 0, %s136
      %s137 = sphi 0, %s134
      %s138 = sphi 0, %s137
      %s154 = sphi 0, %s138
    $region4: #{tpu_custom_call.1} parent=1 // loop_header_branch
      %17 = sbr.rel (%p15) target = $region8
    $region5: #{tpu_custom_call.1} parent=1 // loop_body
      %s19 = ssub.s32 %s14, 1
      %s20 = ssub.s32 %s14, 2
      %s21 = sadd.s32 %s14, 1
      %s22 = ssub.s32 %s14, %s21
      %p23 = scmp.eq.s32.totalorder %s22, 0
      %s25 = sadd.s32 %s24, 1
      %s26 = scalar_select %p23, %s24, %s25
      %p29 = pneg %p23
      %p30 = scmp.eq.s32.totalorder %s14, 1
      %p31 = por %p29, %p30
      %p32 = scmp.ne.s32.totalorder %s24, %s27
      %p33 = scmp.eq.s32.totalorder %s14, 0
      %p34 = por %p32, %p33
      %p35 = scmp.ne.s32.totalorder %s24, %s27
      %p36 = scmp.eq.s32.totalorder %s19, 1
      %p37 = por %p35, %p36
      %p38 = scmp.ne.s32.totalorder %s27, %s28
      %p39 = scmp.eq.s32.totalorder %s19, 0
      %p40 = por %p38, %p39
      %p41 = scmp.ne.s32.totalorder %s27, %s28
      %p42 = scmp.eq.s32.totalorder %s20, 1
      %p43 = por %p41, %p42
      %p45 = scmp.ne.s32.totalorder %s28, %s44
      %p46 = scmp.eq.s32.totalorder %s20, 0
      %p47 = por %p45, %p46
      %s49 = sadd.s32 %s48, 1
      %p52 = scmp.eq.s32.totalorder %s14, 1
      %p53 = scmp.ne.s32.totalorder %s48, %s50
      %p54 = scmp.eq.s32.totalorder %s14, 0
      %p55 = por %p53, %p54
      %p56 = scmp.ne.s32.totalorder %s48, %s50
      %p57 = scmp.eq.s32.totalorder %s19, 1
      %p58 = por %p56, %p57
      %p59 = scmp.ne.s32.totalorder %s50, %s51
      %p60 = scmp.eq.s32.totalorder %s19, 0
      %p61 = por %p59, %p60
      %p62 = scmp.ne.s32.totalorder %s50, %s51
      %p63 = scmp.eq.s32.totalorder %s20, 1
      %p64 = por %p62, %p63
      %p66 = scmp.ne.s32.totalorder %s51, %s65
      %p67 = scmp.eq.s32.totalorder %s20, 0
      %p68 = por %p66, %p67
      %s70 = sadd.s32 %s69, 1
      %p73 = scmp.eq.s32.totalorder %s14, 1
      %p74 = scmp.ne.s32.totalorder %s69, %s71
      %p75 = scmp.eq.s32.totalorder %s14, 0
      %p76 = por %p74, %p75
      %p77 = scmp.ne.s32.totalorder %s69, %s71
      %p78 = scmp.eq.s32.totalorder %s19, 1
      %p79 = por %p77, %p78
      %p80 = scmp.ne.s32.totalorder %s71, %s72
      %p81 = scmp.eq.s32.totalorder %s19, 0
      %p82 = por %p80, %p81
      %p83 = scmp.ne.s32.totalorder %s71, %s72
      %p84 = scmp.eq.s32.totalorder %s20, 1
      %p85 = por %p83, %p84
      %p87 = scmp.ne.s32.totalorder %s72, %s86
      %p88 = scmp.eq.s32.totalorder %s20, 0
      %p89 = por %p87, %p88
      %s91 = sadd.s32 %s90, 1
      %p94 = scmp.eq.s32.totalorder %s14, 1
      %p95 = scmp.ne.s32.totalorder %s90, %s92
      %p96 = scmp.eq.s32.totalorder %s14, 0
      %p97 = por %p95, %p96
      %p98 = scmp.ne.s32.totalorder %s90, %s92
      %p99 = scmp.eq.s32.totalorder %s19, 1
      %p100 = por %p98, %p99
      %p101 = scmp.ne.s32.totalorder %s92, %s93
      %p102 = scmp.eq.s32.totalorder %s19, 0
      %p103 = por %p101, %p102
      %p104 = scmp.ne.s32.totalorder %s92, %s93
      %p105 = scmp.eq.s32.totalorder %s20, 1
      %p106 = por %p104, %p105
      %p108 = scmp.ne.s32.totalorder %s93, %s107
      %p109 = scmp.eq.s32.totalorder %s20, 0
      %p110 = por %p108, %p109
      %s112 = sadd.s32 %s111, 1
      %p115 = scmp.eq.s32.totalorder %s14, 1
      %p116 = scmp.ne.s32.totalorder %s111, %s113
      %p117 = scmp.eq.s32.totalorder %s14, 0
      %p118 = por %p116, %p117
      %p119 = scmp.ne.s32.totalorder %s111, %s113
      %p120 = scmp.eq.s32.totalorder %s19, 1
      %p121 = por %p119, %p120
      %p122 = scmp.ne.s32.totalorder %s113, %s114
      %p123 = scmp.eq.s32.totalorder %s19, 0
      %p124 = por %p122, %p123
      %p125 = scmp.ne.s32.totalorder %s113, %s114
      %p126 = scmp.eq.s32.totalorder %s20, 1
      %p127 = por %p125, %p126
      %p129 = scmp.ne.s32.totalorder %s114, %s128
      %p130 = scmp.eq.s32.totalorder %s20, 0
      %p131 = por %p129, %p130
      %s132 = ssub.s32 %s14, %s21
      %p133 = scmp.eq.s32.totalorder %s132, 0
      %s135 = sadd.s32 %s134, 1
      %s136 = scalar_select %p133, %s134, %s135
      %p139 = pneg %p133
      %p140 = scmp.eq.s32.totalorder %s14, 1
      %p141 = por %p139, %p140
      %p142 = scmp.ne.s32.totalorder %s134, %s137
      %p143 = scmp.eq.s32.totalorder %s14, 0
      %p144 = por %p142, %p143
      %p145 = scmp.ne.s32.totalorder %s134, %s137
      %p146 = scmp.eq.s32.totalorder %s19, 1
      %p147 = por %p145, %p146
      %p148 = scmp.ne.s32.totalorder %s137, %s138
      %p149 = scmp.eq.s32.totalorder %s19, 0
      %p150 = por %p148, %p149
      %p151 = scmp.ne.s32.totalorder %s137, %s138
      %p152 = scmp.eq.s32.totalorder %s20, 1
      %p153 = por %p151, %p152
      %p155 = scmp.ne.s32.totalorder %s138, %s154
      %p156 = scmp.eq.s32.totalorder %s20, 0
      %p157 = por %p155, %p156
      %p158 = scmp.le.s32.totalorder 1, %s14
      %p159 = scmp.lt.s32.totalorder %s14, 3
      %p160 = pnand %p158, %p159
      %p161 = pneg %p160
      // Predicated region
      $region9: #{tpu_custom_call.1} parent=5 // pred_check
        _
      $region10: #{tpu_custom_call.1} parent=5 // pred_check_branch
        %163 = sbr.rel (%p160) target = $region12
      $region11: #{tpu_custom_call.1} parent=5 // pred_region
        %s164 = ssub.s32 %s14, 1
        // Predicated region
        $region13: #{tpu_custom_call.1} parent=11 // pred_check
          %p165 = pneg %p61
        $region14: #{tpu_custom_call.1} parent=11 // pred_check_branch
          %167 = sbr.rel (%p165) target = $region16
        $region15: #{tpu_custom_call.1} parent=11 // pred_region
          _
        $region16: #{tpu_custom_call.1} parent=11 // pred_fallthru
          _
        // Predicated region
        $region17: #{tpu_custom_call.1} parent=11 // pred_check
          %p168 = pneg %p82
        $region18: #{tpu_custom_call.1} parent=11 // pred_check_branch
          %170 = sbr.rel (%p168) target = $region20
        $region19: #{tpu_custom_call.1} parent=11 // pred_region
          _
        $region20: #{tpu_custom_call.1} parent=11 // pred_fallthru
          _
        // Predicated region
        $region21: #{tpu_custom_call.1} parent=11 // pred_check
          %p171 = pneg %p103
        $region22: #{tpu_custom_call.1} parent=11 // pred_check_branch
          %173 = sbr.rel (%p171) target = $region24
        $region23: #{tpu_custom_call.1} parent=11 // pred_region
          _
        $region24: #{tpu_custom_call.1} parent=11 // pred_fallthru
          _
        // Predicated region
        $region25: #{tpu_custom_call.1} parent=11 // pred_check
          %p174 = pneg %p124
        $region26: #{tpu_custom_call.1} parent=11 // pred_check_branch
          %176 = sbr.rel (%p174) target = $region28
        $region27: #{tpu_custom_call.1} parent=11 // pred_region
          _
        $region28: #{tpu_custom_call.1} parent=11 // pred_fallthru
          _
      $region12: #{tpu_custom_call.1} parent=5 // pred_fallthru
        _
      %p177 = scmp.lt.s32.totalorder %s14, 2
      // Predicated region
      $region29: #{tpu_custom_call.1} parent=5 // pred_check
        %p178 = pneg %p177
      $region30: #{tpu_custom_call.1} parent=5 // pred_check_branch
        %180 = sbr.rel (%p178) target = $region32
      $region31: #{tpu_custom_call.1} parent=5 // pred_region
        // Predicated region
        $region33: #{tpu_custom_call.1} parent=31 // pred_check
          %p181 = pneg %p34
        $region34: #{tpu_custom_call.1} parent=31 // pred_check_branch
          %183 = sbr.rel (%p181) target = $region36
        $region35: #{tpu_custom_call.1} parent=31 // pred_region
          %s184 = sand.u32 %s24, 1
          %s185 = sand.u32 %s24, 1
          %s186 = smul.addr %s185, 16
          %s187 = scalar_lea.vmem [#allocation2], %s186
          %s188 = smul.addr %s14, 8
          %s189 = scalar_lea.vmem %s0, %s188
          // Predicated region
          $region37: #{tpu_custom_call.1} parent=35 // pred_check
            _
          $region38: #{tpu_custom_call.1} parent=35 // pred_check_branch
            %191 = sbr.rel (0) target = $region40
          $region39: #{tpu_custom_call.1} parent=35 // pred_region
            // Predicated region
            $region41: #{tpu_custom_call.1} parent=39 // pred_check
              _
            $region42: #{tpu_custom_call.1} parent=39 // pred_check_branch
              %193 = sbr.rel (0) target = $region44
            $region43: #{tpu_custom_call.1} parent=39 // pred_region
              // Predicated region
              $region56: #{tpu_custom_call.1} parent=43 // pred_check
                _
              $region57: #{tpu_custom_call.1} parent=43 // pred_check_branch
                %211 = sbr.rel (0) target = $region59
              $region58: #{tpu_custom_call.1} parent=43 // pred_region
                loop: start=0, step=1, limit=1
                $region60: #{tpu_custom_call.1} parent=58 // loop_pre_header
                  _
                $region61: #{tpu_custom_call.1} parent=58 // loop_header
                  %s213 = sphi 0, %s217
                  %p214 = scmp.ge.s32.totalorder %s213, 1
                  %s218 = sphi %s189, %s189
                  %s219 = sphi %s187, %s187
                $region62: #{tpu_custom_call.1} parent=58 // loop_header_branch
                  %216 = sbr.rel (%p214) target = $region66
                $region63: #{tpu_custom_call.1} parent=58 // loop_body
                  %v220 = vld [vmem:[%s218] sm:$0xff]
                  %221 = vst [vmem:[%s219] sm:$0xff] %v220
                  %v222 = vld [vmem:[%s218 + $0x10] sm:$0xff]
                  %223 = vst [vmem:[%s219 + $0x8] sm:$0xff] %v222
                $region64: #{tpu_custom_call.1} parent=58 // loop_footer
                  %s217 = sadd.s32 1, %s213
                $region65: #{tpu_custom_call.1} parent=58 // loop_footer_branch
                  %212 = sbr.rel target = $region61
                $region66: #{tpu_custom_call.1} parent=58 // loop_exit
                  _
              $region59: #{tpu_custom_call.1} parent=43 // pred_fallthru
                _
              // Predicated region
              $region67: #{tpu_custom_call.1} parent=43 // pred_check
                _
              $region68: #{tpu_custom_call.1} parent=43 // pred_check_branch
                %225 = sbr.rel target = $region70
              $region69: #{tpu_custom_call.1} parent=43 // pred_region
                _
              $region70: #{tpu_custom_call.1} parent=43 // pred_fallthru
                _
            $region44: #{tpu_custom_call.1} parent=39 // pred_fallthru
              _
            // Predicated region
            $region45: #{tpu_custom_call.1} parent=39 // pred_check
              _
            $region46: #{tpu_custom_call.1} parent=39 // pred_check_branch
              %195 = sbr.rel target = $region48
            $region47: #{tpu_custom_call.1} parent=39 // pred_region
              %s197 = ssub.s32 256, 1
              loop: start=0, step=1, limit=1
              $region49: #{tpu_custom_call.1} parent=47 // loop_pre_header
                _
              $region50: #{tpu_custom_call.1} parent=47 // loop_header
                %s199 = sphi 0, %s203
                %p200 = scmp.ge.s32.totalorder %s199, 1
                %s204 = sphi %s189, %s189
                %s205 = sphi %s187, %s187
              $region51: #{tpu_custom_call.1} parent=47 // loop_header_branch
                %202 = sbr.rel (%p200) target = $region55
              $region52: #{tpu_custom_call.1} parent=47 // loop_body
                %v206 = vld [vmem:[%s204] sm:%s197]
                %207 = vst [vmem:[%s205] sm:%s197] %v206
                %v208 = vld [vmem:[%s204 + $0x10] sm:%s197]
                %209 = vst [vmem:[%s205 + $0x8] sm:%s197] %v208
              $region53: #{tpu_custom_call.1} parent=47 // loop_footer
                %s203 = sadd.s32 1, %s199
              $region54: #{tpu_custom_call.1} parent=47 // loop_footer_branch
                %198 = sbr.rel target = $region50
              $region55: #{tpu_custom_call.1} parent=47 // loop_exit
                _
            $region48: #{tpu_custom_call.1} parent=39 // pred_fallthru
              _
          $region40: #{tpu_custom_call.1} parent=35 // pred_fallthru
            _
          %226 = vnop
        $region36: #{tpu_custom_call.1} parent=31 // pred_fallthru
          _
      $region32: #{tpu_custom_call.1} parent=5 // pred_fallthru
        _
      %p227 = scmp.le.s32.totalorder 1, %s14
      %p228 = scmp.lt.s32.totalorder %s14, 3
      %p229 = pnand %p227, %p228
      %p230 = pneg %p229
      // Predicated region
      $region71: #{tpu_custom_call.1} parent=5 // pred_check
        _
      $region72: #{tpu_custom_call.1} parent=5 // pred_check_branch
        %232 = sbr.rel (%p229) target = $region74
      $region73: #{tpu_custom_call.1} parent=5 // pred_region
        %s233 = ssub.s32 %s14, 1
        %s234 = sand.u32 %s27, 1
        %s235 = sand.u32 %s27, 1
        %s236 = smul.addr %s235, 16
        %s237 = scalar_lea.vmem [#allocation2], %s236
        // Predicated region
        $region75: #{tpu_custom_call.1} parent=73 // pred_check
          %p238 = pneg %p40
        $region76: #{tpu_custom_call.1} parent=73 // pred_check_branch
          %240 = sbr.rel (%p238) target = $region78
        $region77: #{tpu_custom_call.1} parent=73 // pred_region
          _
        $region78: #{tpu_custom_call.1} parent=73 // pred_fallthru
          _
        %s241 = sand.u32 %s27, 1
        %s242 = sand.u32 %s27, 1
        %s243 = smul.addr %s242, 16
        %s244 = scalar_lea.vmem [#allocation2], %s243
        %p245 = pneg %p40
        %p246 = pneg %p37
        %p247 = pneg %p61
        %p248 = pneg %p58
        %p249 = pneg %p82
        %p250 = pneg %p79
        %p251 = pneg %p103
        %p252 = pneg %p100
        %p253 = pneg %p124
        %p254 = pneg %p121
        %p255 = pneg %p150
        %p256 = pneg %p147
        %s257 = sand.u32 %s137, 1
        %s258 = scalar_lea.sflag [#allocation4], %s257
        %s259 = sand.u32 %s137, 1
        %s260 = smul.addr %s259, 16
        %s261 = scalar_lea.vmem [#allocation3], %s260
        %v262 = vld [vmem:[%s237] sm:$0xff]
        %v263 = vld [vmem:[%s237 + $0x8] sm:$0xff]
        %v264 = vld [vmem:[%s1] sm:$0xff]
        %v265 = vld [vmem:[%s1 + $0x8] sm:$0xff]
        %v266 = vld [vmem:[%s1 + $0x10] sm:$0xff]
        %v267 = vld [vmem:[%s1 + $0x18] sm:$0xff]
        %v268 = vld [vmem:[%s2] sm:$0xff]
        %v269 = vld [vmem:[%s2 + $0x8] sm:$0xff]
        %v270 = vld [vmem:[%s2 + $0x10] sm:$0xff]
        %v271 = vld [vmem:[%s2 + $0x18] sm:$0xff]
        %273 = vset.pattern.permute.xlu0 0
        %274 = vperm.xlu0 %273, %v268
        %v275 = vpop.permute.xlu0 %274
        %278 = vset.pattern.permute.xlu0 0
        %279 = vperm.xlu0 %278, %v269
        %v280 = vpop.permute.xlu0 %279
        %283 = vset.pattern.permute.xlu0 0
        %284 = vperm.xlu0 %283, %v270
        %v285 = vpop.permute.xlu0 %284
        %288 = vset.pattern.permute.xlu0 0
        %289 = vperm.xlu0 %288, %v271
        %v290 = vpop.permute.xlu0 %289
        %vm292 = vcmask 130048
        %v294 = vsel %vm292, %v264, 0
        %v297 = vsel %vm292, %v265, 0
        %v300 = vsel %vm292, %v266, 0
        %v303 = vsel %vm292, %v267, 0
        %305 = vmatprep.subr.mxu0 0.0
        %306 = vmatpush1.msra.mxu0 0.0
        %307 = vmatprep.subr.mxu0 0.0
        %308 = vmatpush1.msra.mxu0 0.0
        %309 = vmatprep.subr.mxu0 0.0
        %310 = vmatpush1.msra.mxu0 0.0
        %311 = vmatprep.subr.mxu0 0.0
        %312 = vmatpush1.msra.mxu0 0.0
        %313 = vmatprep.subr.mxu0 0.0
        %314 = vmatpush1.msra.mxu0 0.0
        %315 = vmatprep.subr.mxu0 0.0
        %316 = vmatpush1.msra.mxu0 0.0
        %317 = vmatprep.subr.mxu0 0.0
        %318 = vmatpush1.msra.mxu0 0.0
        %319 = vmatprep.subr.mxu0 0.0
        %320 = vmatpush1.msra.mxu0 0.0
        %321 = vmatprep.subr.mxu0 0.0
        %322 = vmatpush1.msra.mxu0 0.0
        %323 = vmatprep.subr.mxu0 0.0
        %324 = vmatpush1.msra.mxu0 0.0
        %325 = vmatprep.subr.mxu0 0.0
        %326 = vmatpush1.msra.mxu0 0.0
        %327 = vmatprep.subr.mxu0 0.0
        %328 = vmatpush1.msra.mxu0 0.0
        %329 = vmatprep.subr.mxu0 0.0
        %330 = vmatpush1.msra.mxu0 0.0
        %331 = vmatprep.subr.mxu0 0.0
        %332 = vmatpush1.msra.mxu0 0.0
        %333 = vmatprep.subr.mxu0 0.0
        %334 = vmatpush1.msra.mxu0 %v263
        %335 = vmatprep.subr.mxu0 0.0
        %336 = vmatpush1.msra.mxu0 %v262
        %337 = vmatprep.subr.mxu0 0.0
        %338 = vmatpush2.msra.mxu0 0.0
        %339 = vmatprep.subr.mxu0 0.0
        %340 = vmatpush2.msra.mxu0 0.0
        %341 = vmatprep.subr.mxu0 0.0
        %342 = vmatpush2.msra.mxu0 0.0
        %343 = vmatprep.subr.mxu0 0.0
        %344 = vmatpush2.msra.mxu0 0.0
        %345 = vmatprep.subr.mxu0 0.0
        %346 = vmatpush2.msra.mxu0 0.0
        %347 = vmatprep.subr.mxu0 0.0
        %348 = vmatpush2.msra.mxu0 0.0
        %349 = vmatprep.subr.mxu0 0.0
        %350 = vmatpush2.msra.mxu0 0.0
        %351 = vmatprep.subr.mxu0 0.0
        %352 = vmatpush2.msra.mxu0 0.0
        %353 = vmatprep.subr.mxu0 0.0
        %354 = vmatpush2.msra.mxu0 0.0
        %355 = vmatprep.subr.mxu0 0.0
        %356 = vmatpush2.msra.mxu0 0.0
        %357 = vmatprep.subr.mxu0 0.0
        %358 = vmatpush2.msra.mxu0 0.0
        %359 = vmatprep.subr.mxu0 0.0
        %360 = vmatpush2.msra.mxu0 0.0
        %361 = vmatprep.subr.mxu0 0.0
        %362 = vmatpush2.msra.mxu0 0.0
        %363 = vmatprep.subr.mxu0 0.0
        %364 = vmatpush2.msra.mxu0 0.0
        %365 = vmatprep.subr.mxu0 0.0
        %366 = vmatpush2.msra.mxu0 0.0
        %367 = vmatprep.subr.mxu0 0.0
        %368 = vmatpush2.msra.mxu0 0.0
        %369 = vmatprep.mubr.f32.mxu0 0.0
        %370 = vmatmul.mubr.f32.gmra.mxu0 %v294
        %v371 = vpop.f32.mrf.mxu0
        %v372 = vadd.f32 %v275, %v371
        %v373 = vpop.f32.mrf.mxu0
        %374 = vmatprep.mubr.f32.mxu0 0.0
        %375 = vmatmul.mubr.f32.gmra.mxu0 %v297
        %v376 = vpop.f32.mrf.mxu0
        %v377 = vadd.f32 %v280, %v376
        %v378 = vpop.f32.mrf.mxu0
        %379 = vmatprep.mubr.f32.mxu0 0.0
        %380 = vmatmul.mubr.f32.gmra.mxu0 %v300
        %v381 = vpop.f32.mrf.mxu0
        %v382 = vadd.f32 %v285, %v381
        %v383 = vpop.f32.mrf.mxu0
        %384 = vmatprep.mubr.f32.mxu0 0.0
        %385 = vmatmul.mubr.f32.gmra.mxu0 %v303
        %v386 = vpop.f32.mrf.mxu0
        %v387 = vadd.f32 %v290, %v386
        %v388 = vpop.f32.mrf.mxu0
        %389 = vdwg.mxu0
        %v390 = vtanh.pop %v372
        %v391 = vtanh.pop %v377
        %v392 = vtanh.pop %v382
        %v393 = vtanh.pop %v387
        %v394 = vld [vmem:[%s3] sm:$0xff]
        %v395 = vld [vmem:[%s3 + $0x8] sm:$0xff]
        %v396 = vld [vmem:[%s4] sm:$0xff]
        %v397 = vld [vmem:[%s4 + $0x8] sm:$0xff]
        %399 = vset.pattern.permute.xlu0 0
        %400 = vperm.xlu0 %399, %v396
        %v401 = vpop.permute.xlu0 %400
        %404 = vset.pattern.permute.xlu0 0
        %405 = vperm.xlu0 %404, %v397
        %v406 = vpop.permute.xlu0 %405
        %vm408 = vcmask 261120
        %v410 = vsel %vm408, %v394, 0
        %v413 = vsel %vm408, %v395, 0
        %415 = vmatprep.subr.mxu0 0.0
        %416 = vmatpush1.msra.mxu0 0.0
        %417 = vmatprep.subr.mxu0 0.0
        %418 = vmatpush1.msra.mxu0 0.0
        %419 = vmatprep.subr.mxu0 0.0
        %420 = vmatpush1.msra.mxu0 0.0
        %421 = vmatprep.subr.mxu0 0.0
        %422 = vmatpush1.msra.mxu0 0.0
        %423 = vmatprep.subr.mxu0 0.0
        %424 = vmatpush1.msra.mxu0 0.0
        %425 = vmatprep.subr.mxu0 0.0
        %426 = vmatpush1.msra.mxu0 0.0
        %427 = vmatprep.subr.mxu0 0.0
        %428 = vmatpush1.msra.mxu0 0.0
        %429 = vmatprep.subr.mxu0 0.0
        %430 = vmatpush1.msra.mxu0 0.0
        %431 = vmatprep.subr.mxu0 0.0
        %432 = vmatpush1.msra.mxu0 0.0
        %433 = vmatprep.subr.mxu0 0.0
        %434 = vmatpush1.msra.mxu0 0.0
        %435 = vmatprep.subr.mxu0 0.0
        %436 = vmatpush1.msra.mxu0 0.0
        %437 = vmatprep.subr.mxu0 0.0
        %438 = vmatpush1.msra.mxu0 0.0
        %439 = vmatprep.subr.mxu0 0.0
        %440 = vmatpush1.msra.mxu0 %v393
        %441 = vmatprep.subr.mxu0 0.0
        %442 = vmatpush1.msra.mxu0 %v392
        %443 = vmatprep.subr.mxu0 0.0
        %444 = vmatpush1.msra.mxu0 %v391
        %445 = vmatprep.subr.mxu0 0.0
        %446 = vmatpush1.msra.mxu0 %v390
        %447 = vmatprep.subr.mxu0 0.0
        %448 = vmatpush2.msra.mxu0 0.0
        %449 = vmatprep.subr.mxu0 0.0
        %450 = vmatpush2.msra.mxu0 0.0
        %451 = vmatprep.subr.mxu0 0.0
        %452 = vmatpush2.msra.mxu0 0.0
        %453 = vmatprep.subr.mxu0 0.0
        %454 = vmatpush2.msra.mxu0 0.0
        %455 = vmatprep.subr.mxu0 0.0
        %456 = vmatpush2.msra.mxu0 0.0
        %457 = vmatprep.subr.mxu0 0.0
        %458 = vmatpush2.msra.mxu0 0.0
        %459 = vmatprep.subr.mxu0 0.0
        %460 = vmatpush2.msra.mxu0 0.0
        %461 = vmatprep.subr.mxu0 0.0
        %462 = vmatpush2.msra.mxu0 0.0
        %463 = vmatprep.subr.mxu0 0.0
        %464 = vmatpush2.msra.mxu0 0.0
        %465 = vmatprep.subr.mxu0 0.0
        %466 = vmatpush2.msra.mxu0 0.0
        %467 = vmatprep.subr.mxu0 0.0
        %468 = vmatpush2.msra.mxu0 0.0
        %469 = vmatprep.subr.mxu0 0.0
        %470 = vmatpush2.msra.mxu0 0.0
        %471 = vmatprep.subr.mxu0 0.0
        %472 = vmatpush2.msra.mxu0 0.0
        %473 = vmatprep.subr.mxu0 0.0
        %474 = vmatpush2.msra.mxu0 0.0
        %475 = vmatprep.subr.mxu0 0.0
        %476 = vmatpush2.msra.mxu0 0.0
        %477 = vmatprep.subr.mxu0 0.0
        %478 = vmatpush2.msra.mxu0 0.0
        %479 = vmatprep.mubr.f32.mxu0 0.0
        %480 = vmatmul.mubr.f32.gmra.mxu0 %v410
        %v481 = vpop.f32.mrf.mxu0
        %v482 = vadd.f32 %v401, %v481
        %v483 = vpop.f32.mrf.mxu0
        %484 = vmatprep.mubr.f32.mxu0 0.0
        %485 = vmatmul.mubr.f32.gmra.mxu0 %v413
        %v486 = vpop.f32.mrf.mxu0
        %v487 = vadd.f32 %v406, %v486
        %v488 = vpop.f32.mrf.mxu0
        %489 = vdwg.mxu0
        %490 = vst [vmem:[%s261] sm:$0xff] %v482
        %491 = vst [vmem:[%s261 + $0x8] sm:$0xff] %v487
        %s492 = sand.u32 %s137, 1
        %s493 = scalar_lea.sflag [#allocation4], %s492
        %s494 = sand.u32 %s137, 1
        %s495 = smul.addr %s494, 16
        %s496 = scalar_lea.vmem [#allocation3], %s495
        // Predicated region
        $region79: #{tpu_custom_call.1} parent=73 // pred_check
          %p497 = pneg %p147
        $region80: #{tpu_custom_call.1} parent=73 // pred_check_branch
          %499 = sbr.rel (%p497) target = $region82
        $region81: #{tpu_custom_call.1} parent=73 // pred_region
          %s501 = ssub.s32 256, 256
          %502 = vsyncadd %s493, %s501
          %s503 = smul.addr %s19, 128
          %s504 = scalar_lea.hbm %s5, %s503
          %s505 = sshll.u32 %s496, 4
          %s506 = int_to_ptr.vmem [resolvable:$true] %s505
          %511 = dma.vmem_to_hbm [thread:$0]  %s506, 256, %s504, %s493, 128, 256, 8
        $region82: #{tpu_custom_call.1} parent=73 // pred_fallthru
          _
      $region74: #{tpu_custom_call.1} parent=5 // pred_fallthru
        _
      %p512 = scmp.le.s32.totalorder 2, %s14
      // Predicated region
      $region83: #{tpu_custom_call.1} parent=5 // pred_check
        %p513 = pneg %p512
      $region84: #{tpu_custom_call.1} parent=5 // pred_check_branch
        %515 = sbr.rel (%p513) target = $region86
      $region85: #{tpu_custom_call.1} parent=5 // pred_region
        %s516 = ssub.s32 %s14, 2
        // Predicated region
        $region87: #{tpu_custom_call.1} parent=85 // pred_check
          %p517 = pneg %p153
        $region88: #{tpu_custom_call.1} parent=85 // pred_check_branch
          %519 = sbr.rel (%p517) target = $region90
        $region89: #{tpu_custom_call.1} parent=85 // pred_region
          %s520 = sand.u32 %s138, 1
          %s521 = scalar_lea.sflag [#allocation4], %s520
          %s522 = sand.u32 %s138, 1
          %s523 = smul.addr %s522, 16
          %s524 = scalar_lea.vmem [#allocation3], %s523
          %525 = dma.done %s521, 256
        $region90: #{tpu_custom_call.1} parent=85 // pred_fallthru
          _
      $region86: #{tpu_custom_call.1} parent=5 // pred_fallthru
        _
    $region6: #{tpu_custom_call.1} parent=1 // loop_footer
      %s18 = sadd.s32 1, %s14
    $region7: #{tpu_custom_call.1} parent=1 // loop_footer_branch
      %13 = sbr.rel target = $region3
    $region8: #{tpu_custom_call.1} parent=1 // loop_exit
      _
    %526 = vsyncpa [#allocation4], 1
    %s527 = scalar_lea.sflag [#allocation4], 1
    %528 = vsyncpa %s527, 1

</llo_original>
